<compile_context>
chip_gen: v6e
topology: v6e:2x2x1
jax: 0.10.0
libtpu: 0.0.40
codegen_flags: <defaults>
</compile_context>

<pallas_src>
import jax
import jax.numpy as jnp
from jax.experimental import pallas as pl
from jax.experimental.pallas import tpu as pltpu


def basic_conv2d(x_nchw, w_oihw, gamma, beta, *, stride, padding, eps=1e-3):
    """Forward of BasicConv2d. x: (N, Cin, H, W); weight: (Cout, Cin, K, K)."""
    N, CIN, H, W = x_nchw.shape
    COUT, _, K, _ = w_oihw.shape

    x = x_nchw.astype(jnp.float32)
    if padding:
        x = jnp.pad(x, ((0, 0), (0, 0), (padding, padding), (padding, padding)))
    Hp, Wp = H + 2 * padding, W + 2 * padding
    OH = (Hp - K) // stride + 1
    OW = (Wp - K) // stride + 1
    M = OH * OW          # per-image spatial, lane axis chunk (256 here)
    NM = N * M           # total lane width of the matmul (512, multiple of 128)
    KKC = CIN * K * K
    span_h = (OH - 1) * stride + 1
    span_w = (OW - 1) * stride + 1

    # im2col in the wrapper (cheap XLA slices at this size).  Contraction axis ordered
    # (cin, kh, kw) to match the flattened OIHW weight; batch + spatial are folded onto
    # the lane axis as n-major so the kernel's per-image output slices are 128-aligned.
    taps = [x[:, :, kh:kh + span_h:stride, kw:kw + span_w:stride]   # (N, CIN, OH, OW)
            for kh in range(K) for kw in range(K)]
    stk = jnp.stack(taps, axis=0)                                    # (K*K, N, CIN, OH, OW)
    p_mat = stk.transpose(2, 0, 1, 3, 4).reshape(KKC, NM)            # (CIN*K*K, N*OH*OW)

    w_mat = w_oihw.reshape(COUT, KKC).astype(jnp.float32)            # (COUT, CIN*K*K)
    g_col = gamma.reshape(COUT, 1).astype(jnp.float32)
    b_col = beta.reshape(COUT, 1).astype(jnp.float32)
    inv_cnt = 1.0 / float(NM)

    def fused_kernel(p_ref, w_ref, g_ref, b_ref, o_ref):
        # p_ref: (KKC, NM)  w_ref: (COUT, KKC)  g_ref/b_ref: (COUT, 1)
        # o_ref: (N, COUT, M) -- COUT on sublanes, OH*OW on lanes (NCHW-native).
        # Convolution: ONE 36-deep MXU matmul over all batch elements -> (COUT, NM).
        y = jnp.dot(w_ref[...], p_ref[...], preferred_element_type=jnp.float32)

        # One-pass batch stats over (N, OH, OW): sum and sum-of-squares, f32.
        s = y.sum(axis=1, keepdims=True)                             # (COUT, 1)
        sq = (y * y).sum(axis=1, keepdims=True)                      # (COUT, 1)
        mean = s * inv_cnt
        var = sq * inv_cnt - mean * mean                             # biased variance

        # Fold mean into the affine: o = max(y * scale + bias2, 0).
        scale = jax.lax.rsqrt(var + eps) * g_ref[...]                # (COUT, 1), EUP rsqrt
        bias2 = b_ref[...] - mean * scale                            # (COUT, 1)
        z = jnp.maximum(y * scale + bias2, 0.0)                      # (COUT, NM)

        # Static, 128-aligned lane slices -> unmasked lane-dense stores, NCHW-native.
        for n in range(N):
            o_ref[n] = z[:, n * M:(n + 1) * M]

    vmem = pltpu.MemorySpace.VMEM
    out3d = pl.pallas_call(
        fused_kernel,
        out_shape=jax.ShapeDtypeStruct((N, COUT, M), jnp.float32),
        in_specs=[pl.BlockSpec(memory_space=vmem)] * 4,
        out_specs=pl.BlockSpec(memory_space=vmem),
    )(p_mat, w_mat, g_col, b_col)

    # (N, COUT, OH*OW) -> (N, COUT, OH, OW): pure reshape, no transpose needed.
    return out3d.reshape(N, COUT, OH, OW)


# ---- pure-JAX reference for verification --------------------------------------
def reference(x_nchw, w_oihw, gamma, beta, *, stride, padding, eps=1e-3):
    y = jax.lax.conv_general_dilated(
        x_nchw, w_oihw,
        window_strides=(stride, stride),
        padding=[(padding, padding), (padding, padding)],
        dimension_numbers=("NCHW", "OIHW", "NCHW"),
    )
    mean = jnp.mean(y, axis=(0, 2, 3), keepdims=True)
    var = jnp.mean((y - mean) ** 2, axis=(0, 2, 3), keepdims=True)
    yn = (y - mean) * jax.lax.rsqrt(var + eps)
    yn = yn * gamma.reshape(1, -1, 1, 1) + beta.reshape(1, -1, 1, 1)
    return jnp.maximum(yn, 0.0)


if __name__ == "__main__":
    # Module config: BasicConv2d(in_planes=4, out_planes=8, kernel_size=3, stride=1, padding=1)
    N, CIN, H, W = 2, 4, 16, 16
    COUT, K, STRIDE, PAD = 8, 3, 1, 1

    key = jax.random.PRNGKey(0)
    kx, kw, kg, kb = jax.random.split(key, 4)
    x = jax.random.normal(kx, (N, CIN, H, W), jnp.float32)
    w = jax.random.normal(kw, (COUT, CIN, K, K), jnp.float32) * 0.1   # conv weight, no bias
    gamma = 1.0 + 0.1 * jax.random.normal(kg, (COUT,), jnp.float32)   # bn.weight
    beta = 0.1 * jax.random.normal(kb, (COUT,), jnp.float32)          # bn.bias

    out = basic_conv2d(x, w, gamma, beta, stride=STRIDE, padding=PAD, eps=1e-3)
    out = jax.block_until_ready(out)

    ref = reference(x, w, gamma, beta, stride=STRIDE, padding=PAD, eps=1e-3)
    assert out.shape == (N, COUT, H, W), out.shape
    assert jnp.allclose(out, ref, atol=1e-4, rtol=1e-4), float(jnp.max(jnp.abs(out - ref)))
    print("KERNEL_OK")
</pallas_src>

<mosaic_0001>
module attributes {stable_mosaic.version = 11 : i64} {
  func.func @fused_kernel(%arg0: memref<36x512xf32, #tpu.memory_space<vmem>>, %arg1: memref<8x36xf32, #tpu.memory_space<vmem>>, %arg2: memref<8x1xf32, #tpu.memory_space<vmem>>, %arg3: memref<8x1xf32, #tpu.memory_space<vmem>>, %arg4: memref<2x8x256xf32, #tpu.memory_space<vmem>>) attributes {dimension_semantics = [], scalar_prefetch = 0 : i64, scratch_operands = 0 : i64, tpu.core_type = #tpu.core_type<tc>} {
    %c0 = arith.constant 0 : index
    %c0_0 = arith.constant 0 : index
    %0 = vector.load %arg1[%c0, %c0_0] : memref<8x36xf32, #tpu.memory_space<vmem>>, vector<8x36xf32>
    %c0_1 = arith.constant 0 : index
    %c0_2 = arith.constant 0 : index
    %1 = vector.load %arg0[%c0_1, %c0_2] : memref<36x512xf32, #tpu.memory_space<vmem>>, vector<36x512xf32>
    %cst = arith.constant dense<0.000000e+00> : vector<8x512xf32>
    %2 = tpu.matmul %0, %1, %cst {dimension_numbers = #tpu.dot_dimension_numbers<[1], [0], [0], [1], [0, 0, 1, 1], [], []>} : vector<8x36xf32>, vector<36x512xf32>, vector<8x512xf32> -> vector<8x512xf32>
    %cst_3 = arith.constant dense<0.000000e+00> : vector<8xf32>
    %3 = vector.multi_reduction <add>, %2, %cst_3 [1] : vector<8x512xf32> to vector<8xf32>
    %4 = vector.shape_cast %3 : vector<8xf32> to vector<8x1xf32>
    %5 = arith.mulf %2, %2 : vector<8x512xf32>
    %cst_4 = arith.constant dense<0.000000e+00> : vector<8xf32>
    %6 = vector.multi_reduction <add>, %5, %cst_4 [1] : vector<8x512xf32> to vector<8xf32>
    %7 = vector.shape_cast %6 : vector<8xf32> to vector<8x1xf32>
    %cst_5 = arith.constant 0.001953125 : f32
    %8 = vector.broadcast %cst_5 : f32 to vector<8x1xf32>
    %9 = arith.mulf %4, %8 : vector<8x1xf32>
    %cst_6 = arith.constant 0.001953125 : f32
    %10 = vector.broadcast %cst_6 : f32 to vector<8x1xf32>
    %11 = arith.mulf %7, %10 : vector<8x1xf32>
    %12 = arith.mulf %9, %9 : vector<8x1xf32>
    %13 = arith.subf %11, %12 : vector<8x1xf32>
    %cst_7 = arith.constant 1.000000e-03 : f32
    %14 = vector.broadcast %cst_7 : f32 to vector<8x1xf32>
    %15 = arith.addf %13, %14 : vector<8x1xf32>
    %16 = math.rsqrt %15 : vector<8x1xf32>
    %c0_8 = arith.constant 0 : index
    %c0_9 = arith.constant 0 : index
    %17 = vector.load %arg2[%c0_8, %c0_9] : memref<8x1xf32, #tpu.memory_space<vmem>>, vector<8x1xf32>
    %18 = arith.mulf %16, %17 : vector<8x1xf32>
    %c0_10 = arith.constant 0 : index
    %c0_11 = arith.constant 0 : index
    %19 = vector.load %arg3[%c0_10, %c0_11] : memref<8x1xf32, #tpu.memory_space<vmem>>, vector<8x1xf32>
    %20 = arith.mulf %9, %18 : vector<8x1xf32>
    %21 = arith.subf %19, %20 : vector<8x1xf32>
    %22 = vector.broadcast %18 : vector<8x1xf32> to vector<8x512xf32>
    %23 = arith.mulf %2, %22 : vector<8x512xf32>
    %24 = vector.broadcast %21 : vector<8x1xf32> to vector<8x512xf32>
    %25 = arith.addf %23, %24 : vector<8x512xf32>
    %cst_12 = arith.constant 0.000000e+00 : f32
    %26 = vector.broadcast %cst_12 : f32 to vector<8x512xf32>
    %27 = arith.maximumf %25, %26 : vector<8x512xf32>
    %28 = vector.extract_strided_slice %27 {offsets = [0, 0], sizes = [8, 256], strides = [1, 1]} : vector<8x512xf32> to vector<8x256xf32>
    %c0_13 = arith.constant 0 : index
    %c0_14 = arith.constant 0 : index
    %c0_15 = arith.constant 0 : index
    %29 = vector.load %arg4[%c0_13, %c0_14, %c0_15] : memref<2x8x256xf32, #tpu.memory_space<vmem>>, vector<1x8x256xf32>
    %30 = vector.shape_cast %29 : vector<1x8x256xf32> to vector<8x256xf32>
    %31 = vector.shape_cast %28 : vector<8x256xf32> to vector<1x8x256xf32>
    tpu.vector_store %arg4[%c0_13, %c0_14, %c0_15], %31 {strides = array<i32>} : memref<2x8x256xf32, #tpu.memory_space<vmem>>, vector<1x8x256xf32>,
    %32 = vector.extract_strided_slice %27 {offsets = [0, 256], sizes = [8, 256], strides = [1, 1]} : vector<8x512xf32> to vector<8x256xf32>
    %c1 = arith.constant 1 : index
    %c0_16 = arith.constant 0 : index
    %c0_17 = arith.constant 0 : index
    %33 = vector.load %arg4[%c1, %c0_16, %c0_17] : memref<2x8x256xf32, #tpu.memory_space<vmem>>, vector<1x8x256xf32>
    %34 = vector.shape_cast %33 : vector<1x8x256xf32> to vector<8x256xf32>
    %35 = vector.shape_cast %32 : vector<8x256xf32> to vector<1x8x256xf32>
    tpu.vector_store %arg4[%c1, %c0_16, %c0_17], %35 {strides = array<i32>} : memref<2x8x256xf32, #tpu.memory_space<vmem>>, vector<1x8x256xf32>,
    return
  }
}

</mosaic_0001>

<llo_original>
// kernel: tpu_custom_call.1
$region0: #{tpu_custom_call.1}
  #allocation0 [shape = 'u32[]', space=smem, size = 0x4, offset = 0x4, fixed_abs, tag = 'smem constant byte address 0x4 - core index']
  #allocation1 [shape = 'u32[144,128]{1,0:T(1,128)}', space=vmem, size = 0x12000, scoped, tag = 'internal scratch']
  %s0 = inlined_call_operand.hbm [shape: f32[36,512], index: 0, kind: input, shape index: {}]
  %s1 = inlined_call_operand.vmem [shape: f32[8,36], index: 1, kind: input, shape index: {}]
  %s2 = inlined_call_operand.vmem [shape: f32[8,1], index: 2, kind: input, shape index: {}]
  %s3 = inlined_call_operand.vmem [shape: f32[8,1], index: 3, kind: input, shape index: {}]
  %s4 = inlined_call_operand.hbm [shape: f32[2,8,256], index: 4, kind: output, shape index: {}]
  %s5 = sld [smem:[#allocation0]]
  $region30: #{tpu_custom_call.1} parent=0
    _
  %s7 = ssub.s32 1, %s5
  %s8 = scalar_select 0, %s7, %s5
  $region1: #{tpu_custom_call.1} parent=0
    #allocation2 [shape = 'u8[81920]{0}', space=vmem, size = 0x14000, scoped, tag = 'input window, operand 0, single buffered']
    #allocation3 [shape = 's32[1]{0}', space=sflag, size = 0x4, scoped, tag = 'scoped memory for tpu_custom_call.1']
    #allocation4 [shape = 's32[1]{0}', space=sflag, size = 0x4, scoped, tag = 'scoped memory for tpu_custom_call.1']
    #allocation5 [shape = 'u8[16384]{0}', space=vmem, size = 0x4000, scoped, tag = 'output window, operand 0, single buffered']
    %9 = vsyncpa [#allocation3], 0
    %10 = vsyncpa [#allocation4], 0
    // Predicated region
    $region2: #{tpu_custom_call.1} parent=1 // pred_check
      _
    $region3: #{tpu_custom_call.1} parent=1 // pred_check_branch
      %12 = sbr.rel (0) target = $region5
    $region4: #{tpu_custom_call.1} parent=1 // pred_region
      %s14 = ssub.s32 2560, 2560
      %15 = vsyncadd [#allocation3], %s14
      %s16 = sshll.u32 [#allocation2], 4
      %s17 = int_to_ptr.vmem [resolvable:$true] %s16
      %22 = dma.hbm_to_vmem [thread:$0]  %s0, 2560, %s17, [#allocation3], 512, 512, 32
    $region5: #{tpu_custom_call.1} parent=1 // pred_fallthru
      _
    // Predicated region
    $region6: #{tpu_custom_call.1} parent=1 // pred_check
      _
    $region7: #{tpu_custom_call.1} parent=1 // pred_check_branch
      %24 = sbr.rel (0) target = $region9
    $region8: #{tpu_custom_call.1} parent=1 // pred_region
      _
    $region9: #{tpu_custom_call.1} parent=1 // pred_fallthru
      _
    // Predicated region
    $region10: #{tpu_custom_call.1} parent=1 // pred_check
      _
    $region11: #{tpu_custom_call.1} parent=1 // pred_check_branch
      %26 = sbr.rel (0) target = $region13
    $region12: #{tpu_custom_call.1} parent=1 // pred_region
      _
    $region13: #{tpu_custom_call.1} parent=1 // pred_fallthru
      _
    // Predicated region
    $region14: #{tpu_custom_call.1} parent=1 // pred_check
      _
    $region15: #{tpu_custom_call.1} parent=1 // pred_check_branch
      %28 = sbr.rel (0) target = $region17
    $region16: #{tpu_custom_call.1} parent=1 // pred_region
      _
    $region17: #{tpu_custom_call.1} parent=1 // pred_fallthru
      _
    // Predicated region
    $region18: #{tpu_custom_call.1} parent=1 // pred_check
      _
    $region19: #{tpu_custom_call.1} parent=1 // pred_check_branch
      %30 = sbr.rel (0) target = $region21
    $region20: #{tpu_custom_call.1} parent=1 // pred_region
      %31 = dma.done [#allocation3], 2560
    $region21: #{tpu_custom_call.1} parent=1 // pred_fallthru
      _
    %v32 = vld [vmem:[%s1] sm:$0xff]
    %v33 = vld [vmem:[#allocation2] sm:$0xff]
    %v34 = vld [vmem:[#allocation2 + $0x8] sm:$0xff]
    %v35 = vld [vmem:[#allocation2 + $0x10] sm:$0xff]
    %v36 = vld [vmem:[#allocation2 + $0x18] sm:$0xff]
    %v37 = vld [vmem:[#allocation2 + $0x20] sm:$0xff]
    %v38 = vld [vmem:[#allocation2 + $0x28] sm:$0xff]
    %v39 = vld [vmem:[#allocation2 + $0x30] sm:$0xff]
    %v40 = vld [vmem:[#allocation2 + $0x38] sm:$0xff]
    %v41 = vld [vmem:[#allocation2 + $0x40] sm:$0xff]
    %v42 = vld [vmem:[#allocation2 + $0x48] sm:$0xff]
    %v43 = vld [vmem:[#allocation2 + $0x50] sm:$0xff]
    %v44 = vld [vmem:[#allocation2 + $0x58] sm:$0xff]
    %v45 = vld [vmem:[#allocation2 + $0x60] sm:$0xff]
    %v46 = vld [vmem:[#allocation2 + $0x68] sm:$0xff]
    %v47 = vld [vmem:[#allocation2 + $0x70] sm:$0xff]
    %v48 = vld [vmem:[#allocation2 + $0x78] sm:$0xff]
    %v49 = vld [vmem:[#allocation2 + $0x80] sm:$0xf]
    %v50 = vld [vmem:[#allocation2 + $0x88] sm:$0xf]
    %v51 = vld [vmem:[#allocation2 + $0x90] sm:$0xf]
    %v52 = vld [vmem:[#allocation2 + $0x98] sm:$0xf]
    %vm53 = vcmask 293888
    %v55 = vsel %vm53, %v32, 0
    %vm57 = vcmask 1043456
    %v59 = vsel %vm57, %v49, 0
    %v62 = vsel %vm57, %v50, 0
    %v65 = vsel %vm57, %v51, 0
    %v68 = vsel %vm57, %v52, 0
    %70 = vmatprep.subr.mxu0 0.0
    %71 = vmatpush1.msra.mxu0 0.0
    %72 = vmatprep.subr.mxu0 0.0
    %73 = vmatpush1.msra.mxu0 0.0
    %74 = vmatprep.subr.mxu0 0.0
    %75 = vmatpush1.msra.mxu0 0.0
    %76 = vmatprep.subr.mxu0 0.0
    %77 = vmatpush1.msra.mxu0 0.0
    %78 = vmatprep.subr.mxu0 0.0
    %79 = vmatpush1.msra.mxu0 0.0
    %80 = vmatprep.subr.mxu0 0.0
    %81 = vmatpush1.msra.mxu0 0.0
    %82 = vmatprep.subr.mxu0 0.0
    %83 = vmatpush1.msra.mxu0 0.0
    %84 = vmatprep.subr.mxu0 0.0
    %85 = vmatpush1.msra.mxu0 0.0
    %86 = vmatprep.subr.mxu0 0.0
    %87 = vmatpush1.msra.mxu0 0.0
    %88 = vmatprep.subr.mxu0 0.0
    %89 = vmatpush1.msra.mxu0 0.0
    %90 = vmatprep.subr.mxu0 0.0
    %91 = vmatpush1.msra.mxu0 0.0
    %92 = vmatprep.subr.mxu0 %v62
    %93 = vmatpush1.msra.mxu0 %v59
    %94 = vmatprep.subr.mxu0 %v46
    %95 = vmatpush1.msra.mxu0 %v45
    %96 = vmatprep.subr.mxu0 %v42
    %97 = vmatpush1.msra.mxu0 %v41
    %98 = vmatprep.subr.mxu0 %v38
    %99 = vmatpush1.msra.mxu0 %v37
    %100 = vmatprep.subr.mxu0 %v34
    %101 = vmatpush1.msra.mxu0 %v33
    %102 = vmatprep.subr.mxu0 0.0
    %103 = vmatpush2.msra.mxu0 0.0
    %104 = vmatprep.subr.mxu0 0.0
    %105 = vmatpush2.msra.mxu0 0.0
    %106 = vmatprep.subr.mxu0 0.0
    %107 = vmatpush2.msra.mxu0 0.0
    %108 = vmatprep.subr.mxu0 0.0
    %109 = vmatpush2.msra.mxu0 0.0
    %110 = vmatprep.subr.mxu0 0.0
    %111 = vmatpush2.msra.mxu0 0.0
    %112 = vmatprep.subr.mxu0 0.0
    %113 = vmatpush2.msra.mxu0 0.0
    %114 = vmatprep.subr.mxu0 0.0
    %115 = vmatpush2.msra.mxu0 0.0
    %116 = vmatprep.subr.mxu0 0.0
    %117 = vmatpush2.msra.mxu0 0.0
    %118 = vmatprep.subr.mxu0 0.0
    %119 = vmatpush2.msra.mxu0 0.0
    %120 = vmatprep.subr.mxu0 0.0
    %121 = vmatpush2.msra.mxu0 0.0
    %122 = vmatprep.subr.mxu0 0.0
    %123 = vmatpush2.msra.mxu0 0.0
    %124 = vmatprep.subr.mxu0 0.0
    %125 = vmatpush2.msra.mxu0 0.0
    %126 = vmatprep.subr.mxu0 0.0
    %127 = vmatpush2.msra.mxu0 0.0
    %128 = vmatprep.subr.mxu0 0.0
    %129 = vmatpush2.msra.mxu0 0.0
    %130 = vmatprep.subr.mxu0 0.0
    %131 = vmatpush2.msra.mxu0 0.0
    %132 = vmatprep.subr.mxu0 0.0
    %133 = vmatpush2.msra.mxu0 0.0
    %134 = vmatprep.mubr.f32.mxu0 0.0
    %135 = vmatmul.mubr.f32.gmra.mxu0 %v55
    %v136 = vpop.f32.mrf.mxu0
    %v137 = vadd.f32 0.0, %v136
    %v138 = vpop.f32.mrf.mxu0
    %v139 = vadd.f32 0.0, %v138
    %140 = vdwg.mxu0
    %141 = vmatprep.subr.mxu0 0.0
    %142 = vmatpush1.msra.mxu0 0.0
    %143 = vmatprep.subr.mxu0 0.0
    %144 = vmatpush1.msra.mxu0 0.0
    %145 = vmatprep.subr.mxu0 0.0
    %146 = vmatpush1.msra.mxu0 0.0
    %147 = vmatprep.subr.mxu0 0.0
    %148 = vmatpush1.msra.mxu0 0.0
    %149 = vmatprep.subr.mxu0 0.0
    %150 = vmatpush1.msra.mxu0 0.0
    %151 = vmatprep.subr.mxu0 0.0
    %152 = vmatpush1.msra.mxu0 0.0
    %153 = vmatprep.subr.mxu0 0.0
    %154 = vmatpush1.msra.mxu0 0.0
    %155 = vmatprep.subr.mxu0 0.0
    %156 = vmatpush1.msra.mxu0 0.0
    %157 = vmatprep.subr.mxu0 0.0
    %158 = vmatpush1.msra.mxu0 0.0
    %159 = vmatprep.subr.mxu0 0.0
    %160 = vmatpush1.msra.mxu0 0.0
    %161 = vmatprep.subr.mxu0 0.0
    %162 = vmatpush1.msra.mxu0 0.0
    %163 = vmatprep.subr.mxu0 %v68
    %164 = vmatpush1.msra.mxu0 %v65
    %165 = vmatprep.subr.mxu0 %v48
    %166 = vmatpush1.msra.mxu0 %v47
    %167 = vmatprep.subr.mxu0 %v44
    %168 = vmatpush1.msra.mxu0 %v43
    %169 = vmatprep.subr.mxu0 %v40
    %170 = vmatpush1.msra.mxu0 %v39
    %171 = vmatprep.subr.mxu0 %v36
    %172 = vmatpush1.msra.mxu0 %v35
    %173 = vmatprep.subr.mxu0 0.0
    %174 = vmatpush2.msra.mxu0 0.0
    %175 = vmatprep.subr.mxu0 0.0
    %176 = vmatpush2.msra.mxu0 0.0
    %177 = vmatprep.subr.mxu0 0.0
    %178 = vmatpush2.msra.mxu0 0.0
    %179 = vmatprep.subr.mxu0 0.0
    %180 = vmatpush2.msra.mxu0 0.0
    %181 = vmatprep.subr.mxu0 0.0
    %182 = vmatpush2.msra.mxu0 0.0
    %183 = vmatprep.subr.mxu0 0.0
    %184 = vmatpush2.msra.mxu0 0.0
    %185 = vmatprep.subr.mxu0 0.0
    %186 = vmatpush2.msra.mxu0 0.0
    %187 = vmatprep.subr.mxu0 0.0
    %188 = vmatpush2.msra.mxu0 0.0
    %189 = vmatprep.subr.mxu0 0.0
    %190 = vmatpush2.msra.mxu0 0.0
    %191 = vmatprep.subr.mxu0 0.0
    %192 = vmatpush2.msra.mxu0 0.0
    %193 = vmatprep.subr.mxu0 0.0
    %194 = vmatpush2.msra.mxu0 0.0
    %195 = vmatprep.subr.mxu0 0.0
    %196 = vmatpush2.msra.mxu0 0.0
    %197 = vmatprep.subr.mxu0 0.0
    %198 = vmatpush2.msra.mxu0 0.0
    %199 = vmatprep.subr.mxu0 0.0
    %200 = vmatpush2.msra.mxu0 0.0
    %201 = vmatprep.subr.mxu0 0.0
    %202 = vmatpush2.msra.mxu0 0.0
    %203 = vmatprep.subr.mxu0 0.0
    %204 = vmatpush2.msra.mxu0 0.0
    %205 = vmatprep.mubr.f32.mxu0 0.0
    %206 = vmatmul.mubr.f32.gmra.mxu0 %v55
    %v207 = vpop.f32.mrf.mxu0
    %v208 = vadd.f32 0.0, %v207
    %v209 = vpop.f32.mrf.mxu0
    %v210 = vadd.f32 0.0, %v209
    %211 = vdwg.mxu0
    %v212 = vadd.f32 %v137, %v139
    %v213 = vadd.f32 %v212, %v208
    %v214 = vadd.f32 %v213, %v210
    %215 = vadd.xlane.f32.xlu0 %v214
    %v216 = vpop.xlane.xlu0 %215
    %v217 = vmul.f32 %v137, %v137
    %v218 = vmul.f32 %v139, %v139
    %v219 = vmul.f32 %v208, %v208
    %v220 = vmul.f32 %v210, %v210
    %v221 = vadd.f32 %v217, %v218
    %v222 = vadd.f32 %v221, %v219
    %v223 = vadd.f32 %v222, %v220
    %224 = vadd.xlane.f32.xlu0 %v223
    %v225 = vpop.xlane.xlu0 %224
    %v226 = vmul.f32 %v216, 0.001953125
    %v227 = vmul.f32 %v225, 0.001953125
    %v228 = vmul.f32 %v226, %v226
    %v229 = vsub.f32 %v227, %v228
    %v230 = vadd.f32 %v229, 0.001
    %v231 = vrsqrt.pop %v230
    %v232 = vld [vmem:[%s2] sm:$0xff]
    %v233 = vmul.f32 %v231, %v232
    %v234 = vld [vmem:[%s3] sm:$0xff]
    %v235 = vmul.f32 %v226, %v233
    %v236 = vsub.f32 %v234, %v235
    %238 = vset.pattern.permute.xlu0 0
    %239 = vperm.xlu0 %238, %v233
    %v240 = vpop.permute.xlu0 %239
    %v242 = vmul.f32 %v137, %v240
    %v243 = vmul.f32 %v139, %v240
    %v244 = vmul.f32 %v208, %v240
    %v245 = vmul.f32 %v210, %v240
    %247 = vset.pattern.permute.xlu0 0
    %248 = vperm.xlu0 %247, %v236
    %v249 = vpop.permute.xlu0 %248
    %v251 = vadd.f32 %v242, %v249
    %v252 = vadd.f32 %v243, %v249
    %v253 = vadd.f32 %v244, %v249
    %v254 = vadd.f32 %v245, %v249
    %v255 = vmax.f32 %v251, 0.0
    %v256 = vmax.f32 %v252, 0.0
    %v257 = vmax.f32 %v253, 0.0
    %v258 = vmax.f32 %v254, 0.0
    %259 = vst [vmem:[#allocation5] sm:$0xff] %v255
    %260 = vst [vmem:[#allocation5 + $0x8] sm:$0xff] %v256
    %s261 = scalar_lea.vmem [#allocation5], 16
    %262 = vst [vmem:[%s261] sm:$0xff] %v257
    %263 = vst [vmem:[%s261 + $0x8] sm:$0xff] %v258
    // Predicated region
    $region22: #{tpu_custom_call.1} parent=1 // pred_check
      _
    $region23: #{tpu_custom_call.1} parent=1 // pred_check_branch
      %265 = sbr.rel (0) target = $region25
    $region24: #{tpu_custom_call.1} parent=1 // pred_region
      %s267 = ssub.s32 512, 512
      %268 = vsyncadd [#allocation4], %s267
      %s269 = sshll.u32 [#allocation5], 4
      %s270 = int_to_ptr.vmem [resolvable:$true] %s269
      %275 = dma.vmem_to_hbm [thread:$0]  %s270, 512, %s4, [#allocation4], 256, 256, 16
    $region25: #{tpu_custom_call.1} parent=1 // pred_fallthru
      _
    // Predicated region
    $region26: #{tpu_custom_call.1} parent=1 // pred_check
      _
    $region27: #{tpu_custom_call.1} parent=1 // pred_check_branch
      %277 = sbr.rel (0) target = $region29
    $region28: #{tpu_custom_call.1} parent=1 // pred_region
      %278 = dma.done [#allocation4], 512
    $region29: #{tpu_custom_call.1} parent=1 // pred_fallthru
      _
    %279 = vsyncpa [#allocation3], 1
    %280 = vsyncpa [#allocation4], 1

</llo_original>
